<compile_context>
chip_gen: v5e
topology: v5e:2x2
jax: 0.10.0
libtpu: 0.0.40
codegen_flags: <defaults>
</compile_context>

<pallas_src>
import functools

import jax
import jax.numpy as jnp
from jax import lax
from jax.experimental import pallas as pl
from jax.experimental.pallas import tpu as pltpu

# ----------------------------- model config ---------------------------------
HIDDEN_LAYERS = 2         # nn.ModuleList length
NEURONS = 32              # neurons_per_layer
IN_FEATS = 4              # input_layer: Linear(4, neurons)
OUT_FEATS = 7             # output_layer: Linear(neurons, 7)

LANE = 128
H_PAD = LANE              # hidden width 32 -> 128 (zero padded rows/cols)
OUT_PAD = 8               # 7 output rows -> 8 (one zero pad row)


# ------------------------------ Pallas kernel --------------------------------
def pinn_kernel(x_ref, w_in_ref, b_in_ref, w_h_ref, b_h_ref, w_out_ref,
                b_out_ref, o_ref, *, num_hidden):
    # x_ref:    (IN_FEATS, TN)   transposed input block, lanes = batch
    # w_in_ref: (H_PAD, IN_FEATS)     b_in_ref: (H_PAD, 1)
    # w_h_ref:  (L, H_PAD, H_PAD)     b_h_ref:  (L, H_PAD, 1)
    # w_out_ref:(OUT_PAD, H_PAD)      b_out_ref:(OUT_PAD, 1)
    # o_ref:    (OUT_PAD, TN)
    x = x_ref[...]
    w_in = w_in_ref[...]

    # Input layer: contraction dim is only 4, so do it on the VPU as four
    # broadcast-FMAs instead of a degenerate MXU matmul.
    h = b_in_ref[...] + w_in[:, 0:1] * x[0:1, :]
    for k in range(1, IN_FEATS):
        h = h + w_in[:, k:k + 1] * x[k:k + 1, :]
    h = jnp.tanh(h)                                      # (H_PAD, TN)

    # Hidden layers on the MXU: (128,128) @ (128,TN), f32 accumulation.
    for l in range(num_hidden):                          # small static unroll
        h = jnp.tanh(
            jnp.dot(w_h_ref[l], h, preferred_element_type=jnp.float32)
            + b_h_ref[l])

    # Output layer: (8,128) @ (128,TN) -> (8,TN). Rows == PyTorch out columns.
    out = (jnp.dot(w_out_ref[...], h, preferred_element_type=jnp.float32)
           + b_out_ref[...])

    # Per-row output transforms:
    #   row 0: phi = 0.01 + 0.29*sigmoid(.)   row 1: k  = exp(. - 35)
    #   row 2: pH  = 2 + 10*sigmoid(.)        rows 3..6: relu(.)   row 7: pad
    row = lax.broadcasted_iota(jnp.int32, out.shape, dimension=0)
    sig = jax.nn.sigmoid(out)
    phi = 0.01 + 0.29 * sig
    kk = jnp.exp(out - 35.0)          # overflow on non-k rows is discarded
    ph = 2.0 + 10.0 * sig
    relu = jnp.maximum(out, 0.0)
    result = jnp.where(row == 0, phi,
                       jnp.where(row == 1, kk,
                                 jnp.where(row == 2, ph, relu)))
    o_ref[...] = result.astype(o_ref.dtype)


# ------------------------------ wrapper --------------------------------------
def chemical_erosion_pinn(x, params, *, tile_n=512):
    """x: (N, 4) float32 -> (N, 7) float32."""
    n = x.shape[0]
    w_in, b_in, w_h, b_h, w_out, b_out = params

    # Force tile_n to a multiple of 128 (lane width); pad batch up to a
    # multiple of tile_n (pad columns are zeros, results are sliced off).
    tile_n = max(LANE, (tile_n // LANE) * LANE)
    n_pad = pl.cdiv(n, tile_n) * tile_n
    grid = (n_pad // tile_n,)

    # Compact, feature-major input (4, n_pad): 16 B/row of HBM traffic.
    x_t = jnp.zeros((IN_FEATS, n_pad), jnp.float32).at[:, :n].set(x.T)

    kernel = functools.partial(pinn_kernel, num_hidden=HIDDEN_LAYERS)

    flops = 2 * n_pad * (IN_FEATS * NEURONS
                         + HIDDEN_LAYERS * NEURONS * NEURONS
                         + NEURONS * OUT_FEATS)
    transcendentals = n_pad * (NEURONS * (1 + HIDDEN_LAYERS) + 3)
    weight_bytes = sum(int(p.size) * 4 for p in params)
    bytes_accessed = n_pad * (IN_FEATS + OUT_PAD) * 4 + weight_bytes

    out_t = pl.pallas_call(
        kernel,
        out_shape=jax.ShapeDtypeStruct((OUT_PAD, n_pad), jnp.float32),
        grid_spec=pltpu.PrefetchScalarGridSpec(
            num_scalar_prefetch=0,
            grid=grid,
            in_specs=[
                pl.BlockSpec((IN_FEATS, tile_n), lambda i: (0, i)),
                pl.BlockSpec((H_PAD, IN_FEATS), lambda i: (0, 0)),
                pl.BlockSpec((H_PAD, 1), lambda i: (0, 0)),
                pl.BlockSpec((HIDDEN_LAYERS, H_PAD, H_PAD),
                             lambda i: (0, 0, 0)),
                pl.BlockSpec((HIDDEN_LAYERS, H_PAD, 1), lambda i: (0, 0, 0)),
                pl.BlockSpec((OUT_PAD, H_PAD), lambda i: (0, 0)),
                pl.BlockSpec((OUT_PAD, 1), lambda i: (0, 0)),
            ],
            out_specs=pl.BlockSpec((OUT_PAD, tile_n), lambda i: (0, i)),
        ),
        compiler_params=pltpu.CompilerParams(
            dimension_semantics=("parallel",)),
        cost_estimate=pl.CostEstimate(
            flops=int(flops),
            transcendentals=int(transcendentals),
            bytes_accessed=int(bytes_accessed)),
    )(x_t, w_in, b_in, w_h, b_h, w_out, b_out)

    # Drop the pad row / pad batch columns; back to PyTorch (N, 7) layout.
    return out_t[:OUT_FEATS, :n].T


# --------------------------- deterministic params ----------------------------
def init_params(key):
    """Synthetic weights in PyTorch (out, in) layout, zero padded."""
    ks = jax.random.split(key, 2 + 2 * HIDDEN_LAYERS)
    scale = 0.5

    w_in = jnp.zeros((H_PAD, IN_FEATS), jnp.float32).at[:NEURONS, :].set(
        scale * jax.random.normal(ks[0], (NEURONS, IN_FEATS), jnp.float32))
    b_in = jnp.zeros((H_PAD, 1), jnp.float32).at[:NEURONS, 0].set(
        0.1 * jax.random.normal(ks[1], (NEURONS,), jnp.float32))

    w_h = jnp.zeros((HIDDEN_LAYERS, H_PAD, H_PAD), jnp.float32)
    b_h = jnp.zeros((HIDDEN_LAYERS, H_PAD, 1), jnp.float32)
    for l in range(HIDDEN_LAYERS):
        w_h = w_h.at[l, :NEURONS, :NEURONS].set(
            scale * jax.random.normal(ks[2 + 2 * l], (NEURONS, NEURONS),
                                      jnp.float32))
        b_h = b_h.at[l, :NEURONS, 0].set(
            0.1 * jax.random.normal(ks[3 + 2 * l], (NEURONS,), jnp.float32))

    kw, kb = jax.random.split(jax.random.fold_in(key, 1234))
    w_out = jnp.zeros((OUT_PAD, H_PAD), jnp.float32).at[
        :OUT_FEATS, :NEURONS].set(
        scale * jax.random.normal(kw, (OUT_FEATS, NEURONS), jnp.float32))
    b_out = jnp.zeros((OUT_PAD, 1), jnp.float32).at[:OUT_FEATS, 0].set(
        0.1 * jax.random.normal(kb, (OUT_FEATS,), jnp.float32))

    return (w_in, b_in, w_h, b_h, w_out, b_out)


# ------------------------------ JAX reference ---------------------------------
def reference(x, params):
    w_in, b_in, w_h, b_h, w_out, b_out = params
    h = jnp.tanh(x @ w_in[:NEURONS, :IN_FEATS].T + b_in[:NEURONS, 0])
    for l in range(HIDDEN_LAYERS):
        h = jnp.tanh(h @ w_h[l, :NEURONS, :NEURONS].T + b_h[l, :NEURONS, 0])
    out = h @ w_out[:OUT_FEATS, :NEURONS].T + b_out[:OUT_FEATS, 0]
    phi = 0.01 + 0.29 * jax.nn.sigmoid(out[:, 0:1])
    k = jnp.exp(out[:, 1:2] - 35.0)
    ph = 2.0 + 10.0 * jax.nn.sigmoid(out[:, 2:3])
    rest = jnp.maximum(out[:, 3:7], 0.0)
    return jnp.concatenate([phi, k, ph, rest], axis=1)


if __name__ == "__main__":
    key = jax.random.PRNGKey(0)
    kx, kp = jax.random.split(key)

    N = 256                                   # small demo batch
    x = jax.random.normal(kx, (N, IN_FEATS), jnp.float32)  # (batch, [x,y,z,t])
    params = init_params(kp)

    # tile_n=128 -> grid=2 grid steps (keeps both v7x TensorCores busy).
    out = chemical_erosion_pinn(x, params, tile_n=128)
    out = jax.block_until_ready(out)

    ref = reference(x, params)
    assert out.shape == (N, OUT_FEATS)
    assert jnp.allclose(out, ref, atol=1e-5, rtol=1e-5), "mismatch vs reference"

    print("KERNEL_OK")
</pallas_src>

<mosaic_0001>
module attributes {stable_mosaic.version = 11 : i64} {
  func.func @pinn_kernel(%arg0: i32, %arg1: memref<4x128xf32, #tpu.memory_space<vmem>>, %arg2: memref<128x4xf32, #tpu.memory_space<vmem>>, %arg3: memref<128x1xf32, #tpu.memory_space<vmem>>, %arg4: memref<2x128x128xf32, #tpu.memory_space<vmem>>, %arg5: memref<2x128x1xf32, #tpu.memory_space<vmem>>, %arg6: memref<8x128xf32, #tpu.memory_space<vmem>>, %arg7: memref<8x1xf32, #tpu.memory_space<vmem>>, %arg8: memref<8x128xf32, #tpu.memory_space<vmem>>) attributes {dimension_semantics = [#tpu.dimension_semantics<parallel>], iteration_bounds = array<i64: 2>, scalar_prefetch = 0 : i64, scratch_operands = 0 : i64, tpu.core_type = #tpu.core_type<tc>, window_params = [{transform_indices = @transform_0, window_bounds = array<i64: 4, 128>}, {pipeline_mode = #tpu.pipeline_mode<synchronous>, transform_indices = @transform_1, window_bounds = array<i64: 128, 4>}, {pipeline_mode = #tpu.pipeline_mode<synchronous>, transform_indices = @transform_2, window_bounds = array<i64: 128, 1>}, {pipeline_mode = #tpu.pipeline_mode<synchronous>, transform_indices = @transform_3, window_bounds = array<i64: 2, 128, 128>}, {pipeline_mode = #tpu.pipeline_mode<synchronous>, transform_indices = @transform_4, window_bounds = array<i64: 2, 128, 1>}, {pipeline_mode = #tpu.pipeline_mode<synchronous>, transform_indices = @transform_5, window_bounds = array<i64: 8, 128>}, {pipeline_mode = #tpu.pipeline_mode<synchronous>, transform_indices = @transform_6, window_bounds = array<i64: 8, 1>}, {transform_indices = @transform_7, window_bounds = array<i64: 8, 128>}]} {
    %c0 = arith.constant 0 : index
    %c0_0 = arith.constant 0 : index
    %0 = vector.load %arg1[%c0, %c0_0] : memref<4x128xf32, #tpu.memory_space<vmem>>, vector<4x128xf32>
    %c0_1 = arith.constant 0 : index
    %c0_2 = arith.constant 0 : index
    %1 = vector.load %arg2[%c0_1, %c0_2] : memref<128x4xf32, #tpu.memory_space<vmem>>, vector<128x4xf32>
    %c0_3 = arith.constant 0 : index
    %c0_4 = arith.constant 0 : index
    %2 = vector.load %arg3[%c0_3, %c0_4] : memref<128x1xf32, #tpu.memory_space<vmem>>, vector<128x1xf32>
    %3 = vector.extract_strided_slice %1 {offsets = [0, 0], sizes = [128, 1], strides = [1, 1]} : vector<128x4xf32> to vector<128x1xf32>
    %4 = vector.extract_strided_slice %0 {offsets = [0, 0], sizes = [1, 128], strides = [1, 1]} : vector<4x128xf32> to vector<1x128xf32>
    %5 = vector.broadcast %3 : vector<128x1xf32> to vector<128x128xf32>
    %6 = vector.broadcast %4 : vector<1x128xf32> to vector<128x128xf32>
    %7 = arith.mulf %5, %6 : vector<128x128xf32>
    %8 = vector.broadcast %2 : vector<128x1xf32> to vector<128x128xf32>
    %9 = arith.addf %8, %7 : vector<128x128xf32>
    %10 = vector.extract_strided_slice %1 {offsets = [0, 1], sizes = [128, 1], strides = [1, 1]} : vector<128x4xf32> to vector<128x1xf32>
    %11 = vector.extract_strided_slice %0 {offsets = [1, 0], sizes = [1, 128], strides = [1, 1]} : vector<4x128xf32> to vector<1x128xf32>
    %12 = vector.broadcast %10 : vector<128x1xf32> to vector<128x128xf32>
    %13 = vector.broadcast %11 : vector<1x128xf32> to vector<128x128xf32>
    %14 = arith.mulf %12, %13 : vector<128x128xf32>
    %15 = arith.addf %9, %14 : vector<128x128xf32>
    %16 = vector.extract_strided_slice %1 {offsets = [0, 2], sizes = [128, 1], strides = [1, 1]} : vector<128x4xf32> to vector<128x1xf32>
    %17 = vector.extract_strided_slice %0 {offsets = [2, 0], sizes = [1, 128], strides = [1, 1]} : vector<4x128xf32> to vector<1x128xf32>
    %18 = vector.broadcast %16 : vector<128x1xf32> to vector<128x128xf32>
    %19 = vector.broadcast %17 : vector<1x128xf32> to vector<128x128xf32>
    %20 = arith.mulf %18, %19 : vector<128x128xf32>
    %21 = arith.addf %15, %20 : vector<128x128xf32>
    %22 = vector.extract_strided_slice %1 {offsets = [0, 3], sizes = [128, 1], strides = [1, 1]} : vector<128x4xf32> to vector<128x1xf32>
    %23 = vector.extract_strided_slice %0 {offsets = [3, 0], sizes = [1, 128], strides = [1, 1]} : vector<4x128xf32> to vector<1x128xf32>
    %24 = vector.broadcast %22 : vector<128x1xf32> to vector<128x128xf32>
    %25 = vector.broadcast %23 : vector<1x128xf32> to vector<128x128xf32>
    %26 = arith.mulf %24, %25 : vector<128x128xf32>
    %27 = arith.addf %21, %26 : vector<128x128xf32>
    %28 = math.tanh %27 : vector<128x128xf32>
    %c0_5 = arith.constant 0 : index
    %c0_6 = arith.constant 0 : index
    %c0_7 = arith.constant 0 : index
    %29 = vector.load %arg4[%c0_5, %c0_6, %c0_7] : memref<2x128x128xf32, #tpu.memory_space<vmem>>, vector<1x128x128xf32>
    %30 = vector.shape_cast %29 : vector<1x128x128xf32> to vector<128x128xf32>
    %cst = arith.constant dense<0.000000e+00> : vector<128x128xf32>
    %31 = tpu.matmul %30, %28, %cst {dimension_numbers = #tpu.dot_dimension_numbers<[1], [0], [0], [1], [0, 0, 1, 1], [], []>} : vector<128x128xf32>, vector<128x128xf32>, vector<128x128xf32> -> vector<128x128xf32>
    %c0_8 = arith.constant 0 : index
    %c0_9 = arith.constant 0 : index
    %c0_10 = arith.constant 0 : index
    %32 = vector.load %arg5[%c0_8, %c0_9, %c0_10] : memref<2x128x1xf32, #tpu.memory_space<vmem>>, vector<1x128x1xf32>
    %33 = vector.shape_cast %32 : vector<1x128x1xf32> to vector<128x1xf32>
    %34 = vector.broadcast %33 : vector<128x1xf32> to vector<128x128xf32>
    %35 = arith.addf %31, %34 : vector<128x128xf32>
    %36 = math.tanh %35 : vector<128x128xf32>
    %c1 = arith.constant 1 : index
    %c0_11 = arith.constant 0 : index
    %c0_12 = arith.constant 0 : index
    %37 = vector.load %arg4[%c1, %c0_11, %c0_12] : memref<2x128x128xf32, #tpu.memory_space<vmem>>, vector<1x128x128xf32>
    %38 = vector.shape_cast %37 : vector<1x128x128xf32> to vector<128x128xf32>
    %cst_13 = arith.constant dense<0.000000e+00> : vector<128x128xf32>
    %39 = tpu.matmul %38, %36, %cst_13 {dimension_numbers = #tpu.dot_dimension_numbers<[1], [0], [0], [1], [0, 0, 1, 1], [], []>} : vector<128x128xf32>, vector<128x128xf32>, vector<128x128xf32> -> vector<128x128xf32>
    %c1_14 = arith.constant 1 : index
    %c0_15 = arith.constant 0 : index
    %c0_16 = arith.constant 0 : index
    %40 = vector.load %arg5[%c1_14, %c0_15, %c0_16] : memref<2x128x1xf32, #tpu.memory_space<vmem>>, vector<1x128x1xf32>
    %41 = vector.shape_cast %40 : vector<1x128x1xf32> to vector<128x1xf32>
    %42 = vector.broadcast %41 : vector<128x1xf32> to vector<128x128xf32>
    %43 = arith.addf %39, %42 : vector<128x128xf32>
    %44 = math.tanh %43 : vector<128x128xf32>
    %c0_17 = arith.constant 0 : index
    %c0_18 = arith.constant 0 : index
    %45 = vector.load %arg6[%c0_17, %c0_18] : memref<8x128xf32, #tpu.memory_space<vmem>>, vector<8x128xf32>
    %cst_19 = arith.constant dense<0.000000e+00> : vector<8x128xf32>
    %46 = tpu.matmul %45, %44, %cst_19 {dimension_numbers = #tpu.dot_dimension_numbers<[1], [0], [0], [1], [0, 0, 1, 1], [], []>} : vector<8x128xf32>, vector<128x128xf32>, vector<8x128xf32> -> vector<8x128xf32>
    %c0_20 = arith.constant 0 : index
    %c0_21 = arith.constant 0 : index
    %47 = vector.load %arg7[%c0_20, %c0_21] : memref<8x1xf32, #tpu.memory_space<vmem>>, vector<8x1xf32>
    %48 = vector.broadcast %47 : vector<8x1xf32> to vector<8x128xf32>
    %49 = arith.addf %46, %48 : vector<8x128xf32>
    %50 = tpu.iota {dimensions = array<i32: 0>} : vector<8x128xi32>
    %51 = arith.negf %49 : vector<8x128xf32>
    %52 = math.exp %51 : vector<8x128xf32>
    %cst_22 = arith.constant 1.000000e+00 : f32
    %53 = vector.broadcast %cst_22 : f32 to vector<8x128xf32>
    %54 = arith.addf %53, %52 : vector<8x128xf32>
    %55 = arith.divf %53, %54 : vector<8x128xf32>
    %cst_23 = arith.constant 2.900000e-01 : f32
    %56 = vector.broadcast %cst_23 : f32 to vector<8x128xf32>
    %57 = arith.mulf %56, %55 : vector<8x128xf32>
    %cst_24 = arith.constant 0.00999999977 : f32
    %58 = vector.broadcast %cst_24 : f32 to vector<8x128xf32>
    %59 = arith.addf %58, %57 : vector<8x128xf32>
    %cst_25 = arith.constant 3.500000e+01 : f32
    %60 = vector.broadcast %cst_25 : f32 to vector<8x128xf32>
    %61 = arith.subf %49, %60 : vector<8x128xf32>
    %62 = math.exp %61 : vector<8x128xf32>
    %cst_26 = arith.constant 1.000000e+01 : f32
    %63 = vector.broadcast %cst_26 : f32 to vector<8x128xf32>
    %64 = arith.mulf %63, %55 : vector<8x128xf32>
    %cst_27 = arith.constant 2.000000e+00 : f32
    %65 = vector.broadcast %cst_27 : f32 to vector<8x128xf32>
    %66 = arith.addf %65, %64 : vector<8x128xf32>
    %cst_28 = arith.constant 0.000000e+00 : f32
    %67 = vector.broadcast %cst_28 : f32 to vector<8x128xf32>
    %68 = arith.maximumf %49, %67 : vector<8x128xf32>
    %c0_i32 = arith.constant 0 : i32
    %69 = vector.broadcast %c0_i32 : i32 to vector<8x128xi32>
    %70 = arith.cmpi eq, %50, %69 : vector<8x128xi32>
    %c1_i32 = arith.constant 1 : i32
    %71 = vector.broadcast %c1_i32 : i32 to vector<8x128xi32>
    %72 = arith.cmpi eq, %50, %71 : vector<8x128xi32>
    %c2_i32 = arith.constant 2 : i32
    %73 = vector.broadcast %c2_i32 : i32 to vector<8x128xi32>
    %74 = arith.cmpi eq, %50, %73 : vector<8x128xi32>
    %75 = arith.select %74, %66, %68 : vector<8x128xi1>, vector<8x128xf32>
    %76 = arith.select %72, %62, %75 : vector<8x128xi1>, vector<8x128xf32>
    %77 = arith.select %70, %59, %76 : vector<8x128xi1>, vector<8x128xf32>
    %c0_29 = arith.constant 0 : index
    %c0_30 = arith.constant 0 : index
    %78 = vector.load %arg8[%c0_29, %c0_30] : memref<8x128xf32, #tpu.memory_space<vmem>>, vector<8x128xf32>
    tpu.vector_store %arg8[%c0_29, %c0_30], %77 {strides = array<i32>} : memref<8x128xf32, #tpu.memory_space<vmem>>, vector<8x128xf32>,
    return
  }
  func.func @transform_0(%arg0: i32) -> (i32, i32) {
    %c0_i32 = arith.constant 0 : i32
    %c0_i32_0 = arith.constant 0 : i32
    return %c0_i32, %arg0 : i32, i32
  }
  func.func @transform_1(%arg0: i32) -> (i32, i32) {
    %c0_i32 = arith.constant 0 : i32
    %c0_i32_0 = arith.constant 0 : i32
    %c0_i32_1 = arith.constant 0 : i32
    return %c0_i32, %c0_i32_0 : i32, i32
  }
  func.func @transform_2(%arg0: i32) -> (i32, i32) {
    %c0_i32 = arith.constant 0 : i32
    %c0_i32_0 = arith.constant 0 : i32
    %c0_i32_1 = arith.constant 0 : i32
    return %c0_i32, %c0_i32_0 : i32, i32
  }
  func.func @transform_3(%arg0: i32) -> (i32, i32, i32) {
    %c0_i32 = arith.constant 0 : i32
    %c0_i32_0 = arith.constant 0 : i32
    %c0_i32_1 = arith.constant 0 : i32
    %c0_i32_2 = arith.constant 0 : i32
    return %c0_i32, %c0_i32_0, %c0_i32_1 : i32, i32, i32
  }
  func.func @transform_4(%arg0: i32) -> (i32, i32, i32) {
    %c0_i32 = arith.constant 0 : i32
    %c0_i32_0 = arith.constant 0 : i32
    %c0_i32_1 = arith.constant 0 : i32
    %c0_i32_2 = arith.constant 0 : i32
    return %c0_i32, %c0_i32_0, %c0_i32_1 : i32, i32, i32
  }
  func.func @transform_5(%arg0: i32) -> (i32, i32) {
    %c0_i32 = arith.constant 0 : i32
    %c0_i32_0 = arith.constant 0 : i32
    %c0_i32_1 = arith.constant 0 : i32
    return %c0_i32, %c0_i32_0 : i32, i32
  }
  func.func @transform_6(%arg0: i32) -> (i32, i32) {
    %c0_i32 = arith.constant 0 : i32
    %c0_i32_0 = arith.constant 0 : i32
    %c0_i32_1 = arith.constant 0 : i32
    return %c0_i32, %c0_i32_0 : i32, i32
  }
  func.func @transform_7(%arg0: i32) -> (i32, i32) {
    %c0_i32 = arith.constant 0 : i32
    %c0_i32_0 = arith.constant 0 : i32
    return %c0_i32, %arg0 : i32, i32
  }
}

</mosaic_0001>

<llo_original>
// kernel: tpu_custom_call.1
$region0: #{tpu_custom_call.1}
  #allocation0 [shape = 'u32[]', space=smem, size = 0x4, offset = 0x4, fixed_abs, tag = 'smem constant byte address 0x4 - core index']
  #allocation1 [shape = 'u32[72,128]{1,0:T(1,128)}', space=vmem, size = 0x9000, scoped, tag = 'internal scratch']
  %s0 = inlined_call_operand.vmem [shape: f32[4,256], index: 0, kind: input, shape index: {}]
  %s1 = inlined_call_operand.vmem [shape: f32[128,4], index: 1, kind: input, shape index: {}]
  %s2 = inlined_call_operand.vmem [shape: f32[128,1], index: 2, kind: input, shape index: {}]
  %s3 = inlined_call_operand.vmem [shape: f32[2,128,128], index: 3, kind: input, shape index: {}]
  %s4 = inlined_call_operand.vmem [shape: f32[2,128,1], index: 4, kind: input, shape index: {}]
  %s5 = inlined_call_operand.vmem [shape: f32[8,128], index: 5, kind: input, shape index: {}]
  %s6 = inlined_call_operand.vmem [shape: f32[8,1], index: 6, kind: input, shape index: {}]
  %s7 = inlined_call_operand.hbm [shape: f32[8,256], index: 7, kind: output, shape index: {}]
  %s8 = sld [smem:[#allocation0]]
  $region61: #{tpu_custom_call.1} parent=0
    _
  %s10 = ssub.s32 1, %s8
  %s11 = scalar_select 0, %s10, %s8
  $region1: #{tpu_custom_call.1} parent=0
    #allocation2 [shape = 'u8[8192]{0}', space=vmem, size = 0x2000, scoped, tag = 'output window, operand 0']
    #allocation3 [shape = 's32[2]{0}', space=sflag, size = 0x8, scoped, tag = 'scoped memory for tpu_custom_call.1']
    %12 = vsyncpa [#allocation3], 0
    %s13 = scalar_lea.sflag [#allocation3], 1
    %14 = vsyncpa %s13, 0
    loop: start=0, step=1, limit=4
    $region2: #{tpu_custom_call.1} parent=1 // loop_pre_header
      _
    $region3: #{tpu_custom_call.1} parent=1 // loop_header
      %s16 = sphi 0, %s20
      %p17 = scmp.ge.s32.totalorder %s16, 4
      %s26 = sphi 0, %s28
      %s29 = sphi 0, %s26
      %s30 = sphi 0, %s29
      %s46 = sphi 0, %s30
      %s50 = sphi 0, %s50
      %s52 = sphi 0, %s50
      %s53 = sphi 0, %s52
      %s67 = sphi 0, %s53
      %s71 = sphi 0, %s71
      %s73 = sphi 0, %s71
      %s74 = sphi 0, %s73
      %s88 = sphi 0, %s74
      %s92 = sphi 0, %s92
      %s94 = sphi 0, %s92
      %s95 = sphi 0, %s94
      %s109 = sphi 0, %s95
      %s113 = sphi 0, %s113
      %s115 = sphi 0, %s113
      %s116 = sphi 0, %s115
      %s130 = sphi 0, %s116
      %s134 = sphi 0, %s134
      %s136 = sphi 0, %s134
      %s137 = sphi 0, %s136
      %s151 = sphi 0, %s137
      %s155 = sphi 0, %s155
      %s157 = sphi 0, %s155
      %s158 = sphi 0, %s157
      %s172 = sphi 0, %s158
      %s178 = sphi 0, %s180
      %s181 = sphi 0, %s178
      %s182 = sphi 0, %s181
      %s198 = sphi 0, %s182
    $region4: #{tpu_custom_call.1} parent=1 // loop_header_branch
      %19 = sbr.rel (%p17) target = $region8
    $region5: #{tpu_custom_call.1} parent=1 // loop_body
      %s21 = ssub.s32 %s16, 1
      %s22 = ssub.s32 %s16, 2
      %s23 = sadd.s32 %s16, 1
      %s24 = ssub.s32 %s16, %s23
      %p25 = scmp.eq.s32.totalorder %s24, 0
      %s27 = sadd.s32 %s26, 1
      %s28 = scalar_select %p25, %s26, %s27
      %p31 = pneg %p25
      %p32 = scmp.eq.s32.totalorder %s16, 1
      %p33 = por %p31, %p32
      %p34 = scmp.ne.s32.totalorder %s26, %s29
      %p35 = scmp.eq.s32.totalorder %s16, 0
      %p36 = por %p34, %p35
      %p37 = scmp.ne.s32.totalorder %s26, %s29
      %p38 = scmp.eq.s32.totalorder %s21, 1
      %p39 = por %p37, %p38
      %p40 = scmp.ne.s32.totalorder %s29, %s30
      %p41 = scmp.eq.s32.totalorder %s21, 0
      %p42 = por %p40, %p41
      %p43 = scmp.ne.s32.totalorder %s29, %s30
      %p44 = scmp.eq.s32.totalorder %s22, 1
      %p45 = por %p43, %p44
      %p47 = scmp.ne.s32.totalorder %s30, %s46
      %p48 = scmp.eq.s32.totalorder %s22, 0
      %p49 = por %p47, %p48
      %s51 = sadd.s32 %s50, 1
      %p54 = scmp.eq.s32.totalorder %s16, 1
      %p55 = scmp.ne.s32.totalorder %s50, %s52
      %p56 = scmp.eq.s32.totalorder %s16, 0
      %p57 = por %p55, %p56
      %p58 = scmp.ne.s32.totalorder %s50, %s52
      %p59 = scmp.eq.s32.totalorder %s21, 1
      %p60 = por %p58, %p59
      %p61 = scmp.ne.s32.totalorder %s52, %s53
      %p62 = scmp.eq.s32.totalorder %s21, 0
      %p63 = por %p61, %p62
      %p64 = scmp.ne.s32.totalorder %s52, %s53
      %p65 = scmp.eq.s32.totalorder %s22, 1
      %p66 = por %p64, %p65
      %p68 = scmp.ne.s32.totalorder %s53, %s67
      %p69 = scmp.eq.s32.totalorder %s22, 0
      %p70 = por %p68, %p69
      %s72 = sadd.s32 %s71, 1
      %p75 = scmp.eq.s32.totalorder %s16, 1
      %p76 = scmp.ne.s32.totalorder %s71, %s73
      %p77 = scmp.eq.s32.totalorder %s16, 0
      %p78 = por %p76, %p77
      %p79 = scmp.ne.s32.totalorder %s71, %s73
      %p80 = scmp.eq.s32.totalorder %s21, 1
      %p81 = por %p79, %p80
      %p82 = scmp.ne.s32.totalorder %s73, %s74
      %p83 = scmp.eq.s32.totalorder %s21, 0
      %p84 = por %p82, %p83
      %p85 = scmp.ne.s32.totalorder %s73, %s74
      %p86 = scmp.eq.s32.totalorder %s22, 1
      %p87 = por %p85, %p86
      %p89 = scmp.ne.s32.totalorder %s74, %s88
      %p90 = scmp.eq.s32.totalorder %s22, 0
      %p91 = por %p89, %p90
      %s93 = sadd.s32 %s92, 1
      %p96 = scmp.eq.s32.totalorder %s16, 1
      %p97 = scmp.ne.s32.totalorder %s92, %s94
      %p98 = scmp.eq.s32.totalorder %s16, 0
      %p99 = por %p97, %p98
      %p100 = scmp.ne.s32.totalorder %s92, %s94
      %p101 = scmp.eq.s32.totalorder %s21, 1
      %p102 = por %p100, %p101
      %p103 = scmp.ne.s32.totalorder %s94, %s95
      %p104 = scmp.eq.s32.totalorder %s21, 0
      %p105 = por %p103, %p104
      %p106 = scmp.ne.s32.totalorder %s94, %s95
      %p107 = scmp.eq.s32.totalorder %s22, 1
      %p108 = por %p106, %p107
      %p110 = scmp.ne.s32.totalorder %s95, %s109
      %p111 = scmp.eq.s32.totalorder %s22, 0
      %p112 = por %p110, %p111
      %s114 = sadd.s32 %s113, 1
      %p117 = scmp.eq.s32.totalorder %s16, 1
      %p118 = scmp.ne.s32.totalorder %s113, %s115
      %p119 = scmp.eq.s32.totalorder %s16, 0
      %p120 = por %p118, %p119
      %p121 = scmp.ne.s32.totalorder %s113, %s115
      %p122 = scmp.eq.s32.totalorder %s21, 1
      %p123 = por %p121, %p122
      %p124 = scmp.ne.s32.totalorder %s115, %s116
      %p125 = scmp.eq.s32.totalorder %s21, 0
      %p126 = por %p124, %p125
      %p127 = scmp.ne.s32.totalorder %s115, %s116
      %p128 = scmp.eq.s32.totalorder %s22, 1
      %p129 = por %p127, %p128
      %p131 = scmp.ne.s32.totalorder %s116, %s130
      %p132 = scmp.eq.s32.totalorder %s22, 0
      %p133 = por %p131, %p132
      %s135 = sadd.s32 %s134, 1
      %p138 = scmp.eq.s32.totalorder %s16, 1
      %p139 = scmp.ne.s32.totalorder %s134, %s136
      %p140 = scmp.eq.s32.totalorder %s16, 0
      %p141 = por %p139, %p140
      %p142 = scmp.ne.s32.totalorder %s134, %s136
      %p143 = scmp.eq.s32.totalorder %s21, 1
      %p144 = por %p142, %p143
      %p145 = scmp.ne.s32.totalorder %s136, %s137
      %p146 = scmp.eq.s32.totalorder %s21, 0
      %p147 = por %p145, %p146
      %p148 = scmp.ne.s32.totalorder %s136, %s137
      %p149 = scmp.eq.s32.totalorder %s22, 1
      %p150 = por %p148, %p149
      %p152 = scmp.ne.s32.totalorder %s137, %s151
      %p153 = scmp.eq.s32.totalorder %s22, 0
      %p154 = por %p152, %p153
      %s156 = sadd.s32 %s155, 1
      %p159 = scmp.eq.s32.totalorder %s16, 1
      %p160 = scmp.ne.s32.totalorder %s155, %s157
      %p161 = scmp.eq.s32.totalorder %s16, 0
      %p162 = por %p160, %p161
      %p163 = scmp.ne.s32.totalorder %s155, %s157
      %p164 = scmp.eq.s32.totalorder %s21, 1
      %p165 = por %p163, %p164
      %p166 = scmp.ne.s32.totalorder %s157, %s158
      %p167 = scmp.eq.s32.totalorder %s21, 0
      %p168 = por %p166, %p167
      %p169 = scmp.ne.s32.totalorder %s157, %s158
      %p170 = scmp.eq.s32.totalorder %s22, 1
      %p171 = por %p169, %p170
      %p173 = scmp.ne.s32.totalorder %s158, %s172
      %p174 = scmp.eq.s32.totalorder %s22, 0
      %p175 = por %p173, %p174
      %s176 = ssub.s32 %s16, %s23
      %p177 = scmp.eq.s32.totalorder %s176, 0
      %s179 = sadd.s32 %s178, 1
      %s180 = scalar_select %p177, %s178, %s179
      %p183 = pneg %p177
      %p184 = scmp.eq.s32.totalorder %s16, 1
      %p185 = por %p183, %p184
      %p186 = scmp.ne.s32.totalorder %s178, %s181
      %p187 = scmp.eq.s32.totalorder %s16, 0
      %p188 = por %p186, %p187
      %p189 = scmp.ne.s32.totalorder %s178, %s181
      %p190 = scmp.eq.s32.totalorder %s21, 1
      %p191 = por %p189, %p190
      %p192 = scmp.ne.s32.totalorder %s181, %s182
      %p193 = scmp.eq.s32.totalorder %s21, 0
      %p194 = por %p192, %p193
      %p195 = scmp.ne.s32.totalorder %s181, %s182
      %p196 = scmp.eq.s32.totalorder %s22, 1
      %p197 = por %p195, %p196
      %p199 = scmp.ne.s32.totalorder %s182, %s198
      %p200 = scmp.eq.s32.totalorder %s22, 0
      %p201 = por %p199, %p200
      %p202 = scmp.le.s32.totalorder 1, %s16
      %p203 = scmp.lt.s32.totalorder %s16, 3
      %p204 = pnand %p202, %p203
      %p205 = pneg %p204
      // Predicated region
      $region9: #{tpu_custom_call.1} parent=5 // pred_check
        _
      $region10: #{tpu_custom_call.1} parent=5 // pred_check_branch
        %207 = sbr.rel (%p204) target = $region12
      $region11: #{tpu_custom_call.1} parent=5 // pred_region
        %s208 = ssub.s32 %s16, 1
        // Predicated region
        $region13: #{tpu_custom_call.1} parent=11 // pred_check
          %p209 = pneg %p63
        $region14: #{tpu_custom_call.1} parent=11 // pred_check_branch
          %211 = sbr.rel (%p209) target = $region16
        $region15: #{tpu_custom_call.1} parent=11 // pred_region
          _
        $region16: #{tpu_custom_call.1} parent=11 // pred_fallthru
          _
        // Predicated region
        $region17: #{tpu_custom_call.1} parent=11 // pred_check
          %p212 = pneg %p84
        $region18: #{tpu_custom_call.1} parent=11 // pred_check_branch
          %214 = sbr.rel (%p212) target = $region20
        $region19: #{tpu_custom_call.1} parent=11 // pred_region
          _
        $region20: #{tpu_custom_call.1} parent=11 // pred_fallthru
          _
        // Predicated region
        $region21: #{tpu_custom_call.1} parent=11 // pred_check
          %p215 = pneg %p105
        $region22: #{tpu_custom_call.1} parent=11 // pred_check_branch
          %217 = sbr.rel (%p215) target = $region24
        $region23: #{tpu_custom_call.1} parent=11 // pred_region
          _
        $region24: #{tpu_custom_call.1} parent=11 // pred_fallthru
          _
        // Predicated region
        $region25: #{tpu_custom_call.1} parent=11 // pred_check
          %p218 = pneg %p126
        $region26: #{tpu_custom_call.1} parent=11 // pred_check_branch
          %220 = sbr.rel (%p218) target = $region28
        $region27: #{tpu_custom_call.1} parent=11 // pred_region
          _
        $region28: #{tpu_custom_call.1} parent=11 // pred_fallthru
          _
        // Predicated region
        $region29: #{tpu_custom_call.1} parent=11 // pred_check
          %p221 = pneg %p147
        $region30: #{tpu_custom_call.1} parent=11 // pred_check_branch
          %223 = sbr.rel (%p221) target = $region32
        $region31: #{tpu_custom_call.1} parent=11 // pred_region
          _
        $region32: #{tpu_custom_call.1} parent=11 // pred_fallthru
          _
        // Predicated region
        $region33: #{tpu_custom_call.1} parent=11 // pred_check
          %p224 = pneg %p168
        $region34: #{tpu_custom_call.1} parent=11 // pred_check_branch
          %226 = sbr.rel (%p224) target = $region36
        $region35: #{tpu_custom_call.1} parent=11 // pred_region
          _
        $region36: #{tpu_custom_call.1} parent=11 // pred_fallthru
          _
      $region12: #{tpu_custom_call.1} parent=5 // pred_fallthru
        _
      %p227 = scmp.lt.s32.totalorder %s16, 2
      // Predicated region
      $region37: #{tpu_custom_call.1} parent=5 // pred_check
        %p228 = pneg %p227
      $region38: #{tpu_custom_call.1} parent=5 // pred_check_branch
        %230 = sbr.rel (%p228) target = $region40
      $region39: #{tpu_custom_call.1} parent=5 // pred_region
        // Predicated region
        $region41: #{tpu_custom_call.1} parent=39 // pred_check
          %p231 = pneg %p36
        $region42: #{tpu_custom_call.1} parent=39 // pred_check_branch
          %233 = sbr.rel (%p231) target = $region44
        $region43: #{tpu_custom_call.1} parent=39 // pred_region
          %p234 = scmp.lt.s32.totalorder %s16, 1
          %s235 = scalar_select %p234, %s16, 1
          %s236 = smul.addr %s235, 4
          %s237 = scalar_lea.vmem %s0, %s236
        $region44: #{tpu_custom_call.1} parent=39 // pred_fallthru
          _
      $region40: #{tpu_custom_call.1} parent=5 // pred_fallthru
        _
      %p238 = scmp.le.s32.totalorder 1, %s16
      %p239 = scmp.lt.s32.totalorder %s16, 3
      %p240 = pnand %p238, %p239
      %p241 = pneg %p240
      // Predicated region
      $region45: #{tpu_custom_call.1} parent=5 // pred_check
        _
      $region46: #{tpu_custom_call.1} parent=5 // pred_check_branch
        %243 = sbr.rel (%p240) target = $region48
      $region47: #{tpu_custom_call.1} parent=5 // pred_region
        %s244 = ssub.s32 %s16, 1
        %p245 = scmp.lt.s32.totalorder %s21, 1
        %s246 = scalar_select %p245, %s21, 1
        %s247 = smul.addr %s246, 4
        %s248 = scalar_lea.vmem %s0, %s247
        %p249 = pneg %p42
        %p250 = pneg %p39
        %p251 = pneg %p63
        %p252 = pneg %p60
        %p253 = pneg %p84
        %p254 = pneg %p81
        %p255 = pneg %p105
        %p256 = pneg %p102
        %p257 = pneg %p126
        %p258 = pneg %p123
        %p259 = pneg %p147
        %p260 = pneg %p144
        %p261 = pneg %p168
        %p262 = pneg %p165
        %p263 = pneg %p194
        %p264 = pneg %p191
        %s265 = sand.u32 %s181, 1
        %s266 = scalar_lea.sflag [#allocation3], %s265
        %s267 = sand.u32 %s181, 1
        %s268 = smul.addr %s267, 8
        %s269 = scalar_lea.vmem [#allocation2], %s268
        %p270 = scmp.lt.s32.totalorder %s21, 1
        %s271 = scalar_select %p270, %s21, 1
        %s272 = smul.addr %s271, 4
        %s273 = scalar_lea.vmem %s0, %s272
        %v274 = vld [vmem:[%s273] sm:$0xf]
        %v275 = vld [vmem:[%s1] sm:$0xff]
        %v276 = vld [vmem:[%s1 + $0x8] sm:$0xff]
        %v277 = vld [vmem:[%s1 + $0x10] sm:$0xff]
        %v278 = vld [vmem:[%s1 + $0x18] sm:$0xff]
        %v279 = vld [vmem:[%s1 + $0x20] sm:$0xff]
        %v280 = vld [vmem:[%s1 + $0x28] sm:$0xff]
        %v281 = vld [vmem:[%s1 + $0x30] sm:$0xff]
        %v282 = vld [vmem:[%s1 + $0x38] sm:$0xff]
        %v283 = vld [vmem:[%s1 + $0x40] sm:$0xff]
        %v284 = vld [vmem:[%s1 + $0x48] sm:$0xff]
        %v285 = vld [vmem:[%s1 + $0x50] sm:$0xff]
        %v286 = vld [vmem:[%s1 + $0x58] sm:$0xff]
        %v287 = vld [vmem:[%s1 + $0x60] sm:$0xff]
        %v288 = vld [vmem:[%s1 + $0x68] sm:$0xff]
        %v289 = vld [vmem:[%s1 + $0x70] sm:$0xff]
        %v290 = vld [vmem:[%s1 + $0x78] sm:$0xff]
        %v291 = vld [vmem:[%s2] sm:$0xff]
        %v292 = vld [vmem:[%s2 + $0x8] sm:$0xff]
        %v293 = vld [vmem:[%s2 + $0x10] sm:$0xff]
        %v294 = vld [vmem:[%s2 + $0x18] sm:$0xff]
        %v295 = vld [vmem:[%s2 + $0x20] sm:$0xff]
        %v296 = vld [vmem:[%s2 + $0x28] sm:$0xff]
        %v297 = vld [vmem:[%s2 + $0x30] sm:$0xff]
        %v298 = vld [vmem:[%s2 + $0x38] sm:$0xff]
        %v299 = vld [vmem:[%s2 + $0x40] sm:$0xff]
        %v300 = vld [vmem:[%s2 + $0x48] sm:$0xff]
        %v301 = vld [vmem:[%s2 + $0x50] sm:$0xff]
        %v302 = vld [vmem:[%s2 + $0x58] sm:$0xff]
        %v303 = vld [vmem:[%s2 + $0x60] sm:$0xff]
        %v304 = vld [vmem:[%s2 + $0x68] sm:$0xff]
        %v305 = vld [vmem:[%s2 + $0x70] sm:$0xff]
        %v306 = vld [vmem:[%s2 + $0x78] sm:$0xff]
        %308 = vset.pattern.permute.xlu0 0
        %309 = vperm.xlu0 %308, %v275
        %v310 = vpop.permute.xlu0 %309
        %313 = vset.pattern.permute.xlu0 0
        %314 = vperm.xlu0 %313, %v276
        %v315 = vpop.permute.xlu0 %314
        %318 = vset.pattern.permute.xlu0 0
        %319 = vperm.xlu0 %318, %v277
        %v320 = vpop.permute.xlu0 %319
        %323 = vset.pattern.permute.xlu0 0
        %324 = vperm.xlu0 %323, %v278
        %v325 = vpop.permute.xlu0 %324
        %328 = vset.pattern.permute.xlu0 0
        %329 = vperm.xlu0 %328, %v279
        %v330 = vpop.permute.xlu0 %329
        %333 = vset.pattern.permute.xlu0 0
        %334 = vperm.xlu0 %333, %v280
        %v335 = vpop.permute.xlu0 %334
        %338 = vset.pattern.permute.xlu0 0
        %339 = vperm.xlu0 %338, %v281
        %v340 = vpop.permute.xlu0 %339
        %343 = vset.pattern.permute.xlu0 0
        %344 = vperm.xlu0 %343, %v282
        %v345 = vpop.permute.xlu0 %344
        %348 = vset.pattern.permute.xlu0 0
        %349 = vperm.xlu0 %348, %v283
        %v350 = vpop.permute.xlu0 %349
        %353 = vset.pattern.permute.xlu0 0
        %354 = vperm.xlu0 %353, %v284
        %v355 = vpop.permute.xlu0 %354
        %358 = vset.pattern.permute.xlu0 0
        %359 = vperm.xlu0 %358, %v285
        %v360 = vpop.permute.xlu0 %359
        %363 = vset.pattern.permute.xlu0 0
        %364 = vperm.xlu0 %363, %v286
        %v365 = vpop.permute.xlu0 %364
        %368 = vset.pattern.permute.xlu0 0
        %369 = vperm.xlu0 %368, %v287
        %v370 = vpop.permute.xlu0 %369
        %373 = vset.pattern.permute.xlu0 0
        %374 = vperm.xlu0 %373, %v288
        %v375 = vpop.permute.xlu0 %374
        %378 = vset.pattern.permute.xlu0 0
        %379 = vperm.xlu0 %378, %v289
        %v380 = vpop.permute.xlu0 %379
        %383 = vset.pattern.permute.xlu0 0
        %384 = vperm.xlu0 %383, %v290
        %v385 = vpop.permute.xlu0 %384
        %v387 = vperm.slane %v274, 0
        %v388 = vmul.f32 %v310, %v387
        %v389 = vmul.f32 %v315, %v387
        %v390 = vmul.f32 %v320, %v387
        %v391 = vmul.f32 %v325, %v387
        %v392 = vmul.f32 %v330, %v387
        %v393 = vmul.f32 %v335, %v387
        %v394 = vmul.f32 %v340, %v387
        %v395 = vmul.f32 %v345, %v387
        %v396 = vmul.f32 %v350, %v387
        %v397 = vmul.f32 %v355, %v387
        %v398 = vmul.f32 %v360, %v387
        %v399 = vmul.f32 %v365, %v387
        %v400 = vmul.f32 %v370, %v387
        %v401 = vmul.f32 %v375, %v387
        %v402 = vmul.f32 %v380, %v387
        %v403 = vmul.f32 %v385, %v387
        %405 = vset.pattern.permute.xlu0 0
        %406 = vperm.xlu0 %405, %v291
        %v407 = vpop.permute.xlu0 %406
        %410 = vset.pattern.permute.xlu0 0
        %411 = vperm.xlu0 %410, %v292
        %v412 = vpop.permute.xlu0 %411
        %415 = vset.pattern.permute.xlu0 0
        %416 = vperm.xlu0 %415, %v293
        %v417 = vpop.permute.xlu0 %416
        %420 = vset.pattern.permute.xlu0 0
        %421 = vperm.xlu0 %420, %v294
        %v422 = vpop.permute.xlu0 %421
        %425 = vset.pattern.permute.xlu0 0
        %426 = vperm.xlu0 %425, %v295
        %v427 = vpop.permute.xlu0 %426
        %430 = vset.pattern.permute.xlu0 0
        %431 = vperm.xlu0 %430, %v296
        %v432 = vpop.permute.xlu0 %431
        %435 = vset.pattern.permute.xlu0 0
        %436 = vperm.xlu0 %435, %v297
        %v437 = vpop.permute.xlu0 %436
        %440 = vset.pattern.permute.xlu0 0
        %441 = vperm.xlu0 %440, %v298
        %v442 = vpop.permute.xlu0 %441
        %445 = vset.pattern.permute.xlu0 0
        %446 = vperm.xlu0 %445, %v299
        %v447 = vpop.permute.xlu0 %446
        %450 = vset.pattern.permute.xlu0 0
        %451 = vperm.xlu0 %450, %v300
        %v452 = vpop.permute.xlu0 %451
        %455 = vset.pattern.permute.xlu0 0
        %456 = vperm.xlu0 %455, %v301
        %v457 = vpop.permute.xlu0 %456
        %460 = vset.pattern.permute.xlu0 0
        %461 = vperm.xlu0 %460, %v302
        %v462 = vpop.permute.xlu0 %461
        %465 = vset.pattern.permute.xlu0 0
        %466 = vperm.xlu0 %465, %v303
        %v467 = vpop.permute.xlu0 %466
        %470 = vset.pattern.permute.xlu0 0
        %471 = vperm.xlu0 %470, %v304
        %v472 = vpop.permute.xlu0 %471
        %475 = vset.pattern.permute.xlu0 0
        %476 = vperm.xlu0 %475, %v305
        %v477 = vpop.permute.xlu0 %476
        %480 = vset.pattern.permute.xlu0 0
        %481 = vperm.xlu0 %480, %v306
        %v482 = vpop.permute.xlu0 %481
        %v484 = vadd.f32 %v407, %v388
        %v485 = vadd.f32 %v412, %v389
        %v486 = vadd.f32 %v417, %v390
        %v487 = vadd.f32 %v422, %v391
        %v488 = vadd.f32 %v427, %v392
        %v489 = vadd.f32 %v432, %v393
        %v490 = vadd.f32 %v437, %v394
        %v491 = vadd.f32 %v442, %v395
        %v492 = vadd.f32 %v447, %v396
        %v493 = vadd.f32 %v452, %v397
        %v494 = vadd.f32 %v457, %v398
        %v495 = vadd.f32 %v462, %v399
        %v496 = vadd.f32 %v467, %v400
        %v497 = vadd.f32 %v472, %v401
        %v498 = vadd.f32 %v477, %v402
        %v499 = vadd.f32 %v482, %v403
        %500 = vset.pattern.permute.xlu0 1
        %501 = vperm.xlu0 %500, %v275
        %v502 = vpop.permute.xlu0 %501
        %504 = vset.pattern.permute.xlu0 1
        %505 = vperm.xlu0 %504, %v276
        %v506 = vpop.permute.xlu0 %505
        %508 = vset.pattern.permute.xlu0 1
        %509 = vperm.xlu0 %508, %v277
        %v510 = vpop.permute.xlu0 %509
        %512 = vset.pattern.permute.xlu0 1
        %513 = vperm.xlu0 %512, %v278
        %v514 = vpop.permute.xlu0 %513
        %516 = vset.pattern.permute.xlu0 1
        %517 = vperm.xlu0 %516, %v279
        %v518 = vpop.permute.xlu0 %517
        %520 = vset.pattern.permute.xlu0 1
        %521 = vperm.xlu0 %520, %v280
        %v522 = vpop.permute.xlu0 %521
        %524 = vset.pattern.permute.xlu0 1
        %525 = vperm.xlu0 %524, %v281
        %v526 = vpop.permute.xlu0 %525
        %528 = vset.pattern.permute.xlu0 1
        %529 = vperm.xlu0 %528, %v282
        %v530 = vpop.permute.xlu0 %529
        %532 = vset.pattern.permute.xlu0 1
        %533 = vperm.xlu0 %532, %v283
        %v534 = vpop.permute.xlu0 %533
        %536 = vset.pattern.permute.xlu0 1
        %537 = vperm.xlu0 %536, %v284
        %v538 = vpop.permute.xlu0 %537
        %540 = vset.pattern.permute.xlu0 1
        %541 = vperm.xlu0 %540, %v285
        %v542 = vpop.permute.xlu0 %541
        %544 = vset.pattern.permute.xlu0 1
        %545 = vperm.xlu0 %544, %v286
        %v546 = vpop.permute.xlu0 %545
        %548 = vset.pattern.permute.xlu0 1
        %549 = vperm.xlu0 %548, %v287
        %v550 = vpop.permute.xlu0 %549
        %552 = vset.pattern.permute.xlu0 1
        %553 = vperm.xlu0 %552, %v288
        %v554 = vpop.permute.xlu0 %553
        %556 = vset.pattern.permute.xlu0 1
        %557 = vperm.xlu0 %556, %v289
        %v558 = vpop.permute.xlu0 %557
        %560 = vset.pattern.permute.xlu0 1
        %561 = vperm.xlu0 %560, %v290
        %v562 = vpop.permute.xlu0 %561
        %v564 = vperm.slane %v274, 1
        %v565 = vmul.f32 %v502, %v564
        %v566 = vmul.f32 %v506, %v564
        %v567 = vmul.f32 %v510, %v564
        %v568 = vmul.f32 %v514, %v564
        %v569 = vmul.f32 %v518, %v564
        %v570 = vmul.f32 %v522, %v564
        %v571 = vmul.f32 %v526, %v564
        %v572 = vmul.f32 %v530, %v564
        %v573 = vmul.f32 %v534, %v564
        %v574 = vmul.f32 %v538, %v564
        %v575 = vmul.f32 %v542, %v564
        %v576 = vmul.f32 %v546, %v564
        %v577 = vmul.f32 %v550, %v564
        %v578 = vmul.f32 %v554, %v564
        %v579 = vmul.f32 %v558, %v564
        %v580 = vmul.f32 %v562, %v564
        %v581 = vadd.f32 %v484, %v565
        %v582 = vadd.f32 %v485, %v566
        %v583 = vadd.f32 %v486, %v567
        %v584 = vadd.f32 %v487, %v568
        %v585 = vadd.f32 %v488, %v569
        %v586 = vadd.f32 %v489, %v570
        %v587 = vadd.f32 %v490, %v571
        %v588 = vadd.f32 %v491, %v572
        %v589 = vadd.f32 %v492, %v573
        %v590 = vadd.f32 %v493, %v574
        %v591 = vadd.f32 %v494, %v575
        %v592 = vadd.f32 %v495, %v576
        %v593 = vadd.f32 %v496, %v577
        %v594 = vadd.f32 %v497, %v578
        %v595 = vadd.f32 %v498, %v579
        %v596 = vadd.f32 %v499, %v580
        %597 = vset.pattern.permute.xlu0 2
        %598 = vperm.xlu0 %597, %v275
        %v599 = vpop.permute.xlu0 %598
        %601 = vset.pattern.permute.xlu0 2
        %602 = vperm.xlu0 %601, %v276
        %v603 = vpop.permute.xlu0 %602
        %605 = vset.pattern.permute.xlu0 2
        %606 = vperm.xlu0 %605, %v277
        %v607 = vpop.permute.xlu0 %606
        %609 = vset.pattern.permute.xlu0 2
        %610 = vperm.xlu0 %609, %v278
        %v611 = vpop.permute.xlu0 %610
        %613 = vset.pattern.permute.xlu0 2
        %614 = vperm.xlu0 %613, %v279
        %v615 = vpop.permute.xlu0 %614
        %617 = vset.pattern.permute.xlu0 2
        %618 = vperm.xlu0 %617, %v280
        %v619 = vpop.permute.xlu0 %618
        %621 = vset.pattern.permute.xlu0 2
        %622 = vperm.xlu0 %621, %v281
        %v623 = vpop.permute.xlu0 %622
        %625 = vset.pattern.permute.xlu0 2
        %626 = vperm.xlu0 %625, %v282
        %v627 = vpop.permute.xlu0 %626
        %629 = vset.pattern.permute.xlu0 2
        %630 = vperm.xlu0 %629, %v283
        %v631 = vpop.permute.xlu0 %630
        %633 = vset.pattern.permute.xlu0 2
        %634 = vperm.xlu0 %633, %v284
        %v635 = vpop.permute.xlu0 %634
        %637 = vset.pattern.permute.xlu0 2
        %638 = vperm.xlu0 %637, %v285
        %v639 = vpop.permute.xlu0 %638
        %641 = vset.pattern.permute.xlu0 2
        %642 = vperm.xlu0 %641, %v286
        %v643 = vpop.permute.xlu0 %642
        %645 = vset.pattern.permute.xlu0 2
        %646 = vperm.xlu0 %645, %v287
        %v647 = vpop.permute.xlu0 %646
        %649 = vset.pattern.permute.xlu0 2
        %650 = vperm.xlu0 %649, %v288
        %v651 = vpop.permute.xlu0 %650
        %653 = vset.pattern.permute.xlu0 2
        %654 = vperm.xlu0 %653, %v289
        %v655 = vpop.permute.xlu0 %654
        %657 = vset.pattern.permute.xlu0 2
        %658 = vperm.xlu0 %657, %v290
        %v659 = vpop.permute.xlu0 %658
        %v661 = vperm.slane %v274, 2
        %v662 = vmul.f32 %v599, %v661
        %v663 = vmul.f32 %v603, %v661
        %v664 = vmul.f32 %v607, %v661
        %v665 = vmul.f32 %v611, %v661
        %v666 = vmul.f32 %v615, %v661
        %v667 = vmul.f32 %v619, %v661
        %v668 = vmul.f32 %v623, %v661
        %v669 = vmul.f32 %v627, %v661
        %v670 = vmul.f32 %v631, %v661
        %v671 = vmul.f32 %v635, %v661
        %v672 = vmul.f32 %v639, %v661
        %v673 = vmul.f32 %v643, %v661
        %v674 = vmul.f32 %v647, %v661
        %v675 = vmul.f32 %v651, %v661
        %v676 = vmul.f32 %v655, %v661
        %v677 = vmul.f32 %v659, %v661
        %v678 = vadd.f32 %v581, %v662
        %v679 = vadd.f32 %v582, %v663
        %v680 = vadd.f32 %v583, %v664
        %v681 = vadd.f32 %v584, %v665
        %v682 = vadd.f32 %v585, %v666
        %v683 = vadd.f32 %v586, %v667
        %v684 = vadd.f32 %v587, %v668
        %v685 = vadd.f32 %v588, %v669
        %v686 = vadd.f32 %v589, %v670
        %v687 = vadd.f32 %v590, %v671
        %v688 = vadd.f32 %v591, %v672
        %v689 = vadd.f32 %v592, %v673
        %v690 = vadd.f32 %v593, %v674
        %v691 = vadd.f32 %v594, %v675
        %v692 = vadd.f32 %v595, %v676
        %v693 = vadd.f32 %v596, %v677
        %694 = vset.pattern.permute.xlu0 3
        %695 = vperm.xlu0 %694, %v275
        %v696 = vpop.permute.xlu0 %695
        %698 = vset.pattern.permute.xlu0 3
        %699 = vperm.xlu0 %698, %v276
        %v700 = vpop.permute.xlu0 %699
        %702 = vset.pattern.permute.xlu0 3
        %703 = vperm.xlu0 %702, %v277
        %v704 = vpop.permute.xlu0 %703
        %706 = vset.pattern.permute.xlu0 3
        %707 = vperm.xlu0 %706, %v278
        %v708 = vpop.permute.xlu0 %707
        %710 = vset.pattern.permute.xlu0 3
        %711 = vperm.xlu0 %710, %v279
        %v712 = vpop.permute.xlu0 %711
        %714 = vset.pattern.permute.xlu0 3
        %715 = vperm.xlu0 %714, %v280
        %v716 = vpop.permute.xlu0 %715
        %718 = vset.pattern.permute.xlu0 3
        %719 = vperm.xlu0 %718, %v281
        %v720 = vpop.permute.xlu0 %719
        %722 = vset.pattern.permute.xlu0 3
        %723 = vperm.xlu0 %722, %v282
        %v724 = vpop.permute.xlu0 %723
        %726 = vset.pattern.permute.xlu0 3
        %727 = vperm.xlu0 %726, %v283
        %v728 = vpop.permute.xlu0 %727
        %730 = vset.pattern.permute.xlu0 3
        %731 = vperm.xlu0 %730, %v284
        %v732 = vpop.permute.xlu0 %731
        %734 = vset.pattern.permute.xlu0 3
        %735 = vperm.xlu0 %734, %v285
        %v736 = vpop.permute.xlu0 %735
        %738 = vset.pattern.permute.xlu0 3
        %739 = vperm.xlu0 %738, %v286
        %v740 = vpop.permute.xlu0 %739
        %742 = vset.pattern.permute.xlu0 3
        %743 = vperm.xlu0 %742, %v287
        %v744 = vpop.permute.xlu0 %743
        %746 = vset.pattern.permute.xlu0 3
        %747 = vperm.xlu0 %746, %v288
        %v748 = vpop.permute.xlu0 %747
        %750 = vset.pattern.permute.xlu0 3
        %751 = vperm.xlu0 %750, %v289
        %v752 = vpop.permute.xlu0 %751
        %754 = vset.pattern.permute.xlu0 3
        %755 = vperm.xlu0 %754, %v290
        %v756 = vpop.permute.xlu0 %755
        %v758 = vperm.slane %v274, 3
        %v759 = vmul.f32 %v696, %v758
        %v760 = vmul.f32 %v700, %v758
        %v761 = vmul.f32 %v704, %v758
        %v762 = vmul.f32 %v708, %v758
        %v763 = vmul.f32 %v712, %v758
        %v764 = vmul.f32 %v716, %v758
        %v765 = vmul.f32 %v720, %v758
        %v766 = vmul.f32 %v724, %v758
        %v767 = vmul.f32 %v728, %v758
        %v768 = vmul.f32 %v732, %v758
        %v769 = vmul.f32 %v736, %v758
        %v770 = vmul.f32 %v740, %v758
        %v771 = vmul.f32 %v744, %v758
        %v772 = vmul.f32 %v748, %v758
        %v773 = vmul.f32 %v752, %v758
        %v774 = vmul.f32 %v756, %v758
        %v775 = vadd.f32 %v678, %v759
        %v776 = vadd.f32 %v679, %v760
        %v777 = vadd.f32 %v680, %v761
        %v778 = vadd.f32 %v681, %v762
        %v779 = vadd.f32 %v682, %v763
        %v780 = vadd.f32 %v683, %v764
        %v781 = vadd.f32 %v684, %v765
        %v782 = vadd.f32 %v685, %v766
        %v783 = vadd.f32 %v686, %v767
        %v784 = vadd.f32 %v687, %v768
        %v785 = vadd.f32 %v688, %v769
        %v786 = vadd.f32 %v689, %v770
        %v787 = vadd.f32 %v690, %v771
        %v788 = vadd.f32 %v691, %v772
        %v789 = vadd.f32 %v692, %v773
        %v790 = vadd.f32 %v693, %v774
        %v791 = vtanh.pop %v775
        %v792 = vtanh.pop %v776
        %v793 = vtanh.pop %v777
        %v794 = vtanh.pop %v778
        %v795 = vtanh.pop %v779
        %v796 = vtanh.pop %v780
        %v797 = vtanh.pop %v781
        %v798 = vtanh.pop %v782
        %v799 = vtanh.pop %v783
        %v800 = vtanh.pop %v784
        %v801 = vtanh.pop %v785
        %v802 = vtanh.pop %v786
        %v803 = vtanh.pop %v787
        %v804 = vtanh.pop %v788
        %v805 = vtanh.pop %v789
        %v806 = vtanh.pop %v790
        %v807 = vld [vmem:[%s3] sm:$0xff]
        %v808 = vld [vmem:[%s3 + $0x8] sm:$0xff]
        %v809 = vld [vmem:[%s3 + $0x10] sm:$0xff]
        %v810 = vld [vmem:[%s3 + $0x18] sm:$0xff]
        %v811 = vld [vmem:[%s3 + $0x20] sm:$0xff]
        %v812 = vld [vmem:[%s3 + $0x28] sm:$0xff]
        %v813 = vld [vmem:[%s3 + $0x30] sm:$0xff]
        %v814 = vld [vmem:[%s3 + $0x38] sm:$0xff]
        %v815 = vld [vmem:[%s3 + $0x40] sm:$0xff]
        %v816 = vld [vmem:[%s3 + $0x48] sm:$0xff]
        %v817 = vld [vmem:[%s3 + $0x50] sm:$0xff]
        %v818 = vld [vmem:[%s3 + $0x58] sm:$0xff]
        %v819 = vld [vmem:[%s3 + $0x60] sm:$0xff]
        %v820 = vld [vmem:[%s3 + $0x68] sm:$0xff]
        %v821 = vld [vmem:[%s3 + $0x70] sm:$0xff]
        %v822 = vld [vmem:[%s3 + $0x78] sm:$0xff]
        %v823 = vld [vmem:[%s4] sm:$0xff]
        %v824 = vld [vmem:[%s4 + $0x8] sm:$0xff]
        %v825 = vld [vmem:[%s4 + $0x10] sm:$0xff]
        %v826 = vld [vmem:[%s4 + $0x18] sm:$0xff]
        %v827 = vld [vmem:[%s4 + $0x20] sm:$0xff]
        %v828 = vld [vmem:[%s4 + $0x28] sm:$0xff]
        %v829 = vld [vmem:[%s4 + $0x30] sm:$0xff]
        %v830 = vld [vmem:[%s4 + $0x38] sm:$0xff]
        %v831 = vld [vmem:[%s4 + $0x40] sm:$0xff]
        %v832 = vld [vmem:[%s4 + $0x48] sm:$0xff]
        %v833 = vld [vmem:[%s4 + $0x50] sm:$0xff]
        %v834 = vld [vmem:[%s4 + $0x58] sm:$0xff]
        %v835 = vld [vmem:[%s4 + $0x60] sm:$0xff]
        %v836 = vld [vmem:[%s4 + $0x68] sm:$0xff]
        %v837 = vld [vmem:[%s4 + $0x70] sm:$0xff]
        %v838 = vld [vmem:[%s4 + $0x78] sm:$0xff]
        %840 = vset.pattern.permute.xlu0 0
        %841 = vperm.xlu0 %840, %v823
        %v842 = vpop.permute.xlu0 %841
        %845 = vset.pattern.permute.xlu0 0
        %846 = vperm.xlu0 %845, %v824
        %v847 = vpop.permute.xlu0 %846
        %850 = vset.pattern.permute.xlu0 0
        %851 = vperm.xlu0 %850, %v825
        %v852 = vpop.permute.xlu0 %851
        %855 = vset.pattern.permute.xlu0 0
        %856 = vperm.xlu0 %855, %v826
        %v857 = vpop.permute.xlu0 %856
        %860 = vset.pattern.permute.xlu0 0
        %861 = vperm.xlu0 %860, %v827
        %v862 = vpop.permute.xlu0 %861
        %865 = vset.pattern.permute.xlu0 0
        %866 = vperm.xlu0 %865, %v828
        %v867 = vpop.permute.xlu0 %866
        %870 = vset.pattern.permute.xlu0 0
        %871 = vperm.xlu0 %870, %v829
        %v872 = vpop.permute.xlu0 %871
        %875 = vset.pattern.permute.xlu0 0
        %876 = vperm.xlu0 %875, %v830
        %v877 = vpop.permute.xlu0 %876
        %880 = vset.pattern.permute.xlu0 0
        %881 = vperm.xlu0 %880, %v831
        %v882 = vpop.permute.xlu0 %881
        %885 = vset.pattern.permute.xlu0 0
        %886 = vperm.xlu0 %885, %v832
        %v887 = vpop.permute.xlu0 %886
        %890 = vset.pattern.permute.xlu0 0
        %891 = vperm.xlu0 %890, %v833
        %v892 = vpop.permute.xlu0 %891
        %895 = vset.pattern.permute.xlu0 0
        %896 = vperm.xlu0 %895, %v834
        %v897 = vpop.permute.xlu0 %896
        %900 = vset.pattern.permute.xlu0 0
        %901 = vperm.xlu0 %900, %v835
        %v902 = vpop.permute.xlu0 %901
        %905 = vset.pattern.permute.xlu0 0
        %906 = vperm.xlu0 %905, %v836
        %v907 = vpop.permute.xlu0 %906
        %910 = vset.pattern.permute.xlu0 0
        %911 = vperm.xlu0 %910, %v837
        %v912 = vpop.permute.xlu0 %911
        %915 = vset.pattern.permute.xlu0 0
        %916 = vperm.xlu0 %915, %v838
        %v917 = vpop.permute.xlu0 %916
        %919 = vmatpush.msra.mxu0 %v806
        %920 = vmatpush.msra.mxu0 %v805
        %921 = vmatpush.msra.mxu0 %v804
        %922 = vmatpush.msra.mxu0 %v803
        %923 = vmatpush.msra.mxu0 %v802
        %924 = vmatpush.msra.mxu0 %v801
        %925 = vmatpush.msra.mxu0 %v800
        %926 = vmatpush.msra.mxu0 %v799
        %927 = vmatpush.msra.mxu0 %v798
        %928 = vmatpush.msra.mxu0 %v797
        %929 = vmatpush.msra.mxu0 %v796
        %930 = vmatpush.msra.mxu0 %v795
        %931 = vmatpush.msra.mxu0 %v794
        %932 = vmatpush.msra.mxu0 %v793
        %933 = vmatpush.msra.mxu0 %v792
        %934 = vmatpush.msra.mxu0 %v791
        %935 = vmatmul.f32.gmra.mxu0 %v807
        %v936 = vpop.f32.mrf.mxu0
        %v937 = vadd.f32 %v842, %v936
        %938 = vmatmul.f32.gmra.mxu0 %v808
        %v939 = vpop.f32.mrf.mxu0
        %v940 = vadd.f32 %v847, %v939
        %941 = vmatmul.f32.gmra.mxu0 %v809
        %v942 = vpop.f32.mrf.mxu0
        %v943 = vadd.f32 %v852, %v942
        %944 = vmatmul.f32.gmra.mxu0 %v810
        %v945 = vpop.f32.mrf.mxu0
        %v946 = vadd.f32 %v857, %v945
        %947 = vmatmul.f32.gmra.mxu0 %v811
        %v948 = vpop.f32.mrf.mxu0
        %v949 = vadd.f32 %v862, %v948
        %950 = vmatmul.f32.gmra.mxu0 %v812
        %v951 = vpop.f32.mrf.mxu0
        %v952 = vadd.f32 %v867, %v951
        %953 = vmatmul.f32.gmra.mxu0 %v813
        %v954 = vpop.f32.mrf.mxu0
        %v955 = vadd.f32 %v872, %v954
        %956 = vmatmul.f32.gmra.mxu0 %v814
        %v957 = vpop.f32.mrf.mxu0
        %v958 = vadd.f32 %v877, %v957
        %959 = vmatmul.f32.gmra.mxu0 %v815
        %v960 = vpop.f32.mrf.mxu0
        %v961 = vadd.f32 %v882, %v960
        %962 = vmatmul.f32.gmra.mxu0 %v816
        %v963 = vpop.f32.mrf.mxu0
        %v964 = vadd.f32 %v887, %v963
        %965 = vmatmul.f32.gmra.mxu0 %v817
        %v966 = vpop.f32.mrf.mxu0
        %v967 = vadd.f32 %v892, %v966
        %968 = vmatmul.f32.gmra.mxu0 %v818
        %v969 = vpop.f32.mrf.mxu0
        %v970 = vadd.f32 %v897, %v969
        %971 = vmatmul.f32.gmra.mxu0 %v819
        %v972 = vpop.f32.mrf.mxu0
        %v973 = vadd.f32 %v902, %v972
        %974 = vmatmul.f32.gmra.mxu0 %v820
        %v975 = vpop.f32.mrf.mxu0
        %v976 = vadd.f32 %v907, %v975
        %977 = vmatmul.f32.gmra.mxu0 %v821
        %v978 = vpop.f32.mrf.mxu0
        %v979 = vadd.f32 %v912, %v978
        %980 = vmatmul.f32.gmra.mxu0 %v822
        %v981 = vpop.f32.mrf.mxu0
        %v982 = vadd.f32 %v917, %v981
        %983 = vdwg.mxu0
        %v984 = vtanh.pop %v937
        %v985 = vtanh.pop %v940
        %v986 = vtanh.pop %v943
        %v987 = vtanh.pop %v946
        %v988 = vtanh.pop %v949
        %v989 = vtanh.pop %v952
        %v990 = vtanh.pop %v955
        %v991 = vtanh.pop %v958
        %v992 = vtanh.pop %v961
        %v993 = vtanh.pop %v964
        %v994 = vtanh.pop %v967
        %v995 = vtanh.pop %v970
        %v996 = vtanh.pop %v973
        %v997 = vtanh.pop %v976
        %v998 = vtanh.pop %v979
        %v999 = vtanh.pop %v982
        %s1000 = scalar_lea.vmem %s3, 128
        %v1001 = vld [vmem:[%s1000] sm:$0xff]
        %v1002 = vld [vmem:[%s1000 + $0x8] sm:$0xff]
        %v1003 = vld [vmem:[%s1000 + $0x10] sm:$0xff]
        %v1004 = vld [vmem:[%s1000 + $0x18] sm:$0xff]
        %v1005 = vld [vmem:[%s1000 + $0x20] sm:$0xff]
        %v1006 = vld [vmem:[%s1000 + $0x28] sm:$0xff]
        %v1007 = vld [vmem:[%s1000 + $0x30] sm:$0xff]
        %v1008 = vld [vmem:[%s1000 + $0x38] sm:$0xff]
        %v1009 = vld [vmem:[%s1000 + $0x40] sm:$0xff]
        %v1010 = vld [vmem:[%s1000 + $0x48] sm:$0xff]
        %v1011 = vld [vmem:[%s1000 + $0x50] sm:$0xff]
        %v1012 = vld [vmem:[%s1000 + $0x58] sm:$0xff]
        %v1013 = vld [vmem:[%s1000 + $0x60] sm:$0xff]
        %v1014 = vld [vmem:[%s1000 + $0x68] sm:$0xff]
        %v1015 = vld [vmem:[%s1000 + $0x70] sm:$0xff]
        %v1016 = vld [vmem:[%s1000 + $0x78] sm:$0xff]
        %s1017 = scalar_lea.vmem %s4, 128
        %v1018 = vld [vmem:[%s1017] sm:$0xff]
        %v1019 = vld [vmem:[%s1017 + $0x8] sm:$0xff]
        %v1020 = vld [vmem:[%s1017 + $0x10] sm:$0xff]
        %v1021 = vld [vmem:[%s1017 + $0x18] sm:$0xff]
        %v1022 = vld [vmem:[%s1017 + $0x20] sm:$0xff]
        %v1023 = vld [vmem:[%s1017 + $0x28] sm:$0xff]
        %v1024 = vld [vmem:[%s1017 + $0x30] sm:$0xff]
        %v1025 = vld [vmem:[%s1017 + $0x38] sm:$0xff]
        %v1026 = vld [vmem:[%s1017 + $0x40] sm:$0xff]
        %v1027 = vld [vmem:[%s1017 + $0x48] sm:$0xff]
        %v1028 = vld [vmem:[%s1017 + $0x50] sm:$0xff]
        %v1029 = vld [vmem:[%s1017 + $0x58] sm:$0xff]
        %v1030 = vld [vmem:[%s1017 + $0x60] sm:$0xff]
        %v1031 = vld [vmem:[%s1017 + $0x68] sm:$0xff]
        %v1032 = vld [vmem:[%s1017 + $0x70] sm:$0xff]
        %v1033 = vld [vmem:[%s1017 + $0x78] sm:$0xff]
        %1035 = vset.pattern.permute.xlu0 0
        %1036 = vperm.xlu0 %1035, %v1018
        %v1037 = vpop.permute.xlu0 %1036
        %1040 = vset.pattern.permute.xlu0 0
        %1041 = vperm.xlu0 %1040, %v1019
        %v1042 = vpop.permute.xlu0 %1041
        %1045 = vset.pattern.permute.xlu0 0
        %1046 = vperm.xlu0 %1045, %v1020
        %v1047 = vpop.permute.xlu0 %1046
        %1050 = vset.pattern.permute.xlu0 0
        %1051 = vperm.xlu0 %1050, %v1021
        %v1052 = vpop.permute.xlu0 %1051
        %1055 = vset.pattern.permute.xlu0 0
        %1056 = vperm.xlu0 %1055, %v1022
        %v1057 = vpop.permute.xlu0 %1056
        %1060 = vset.pattern.permute.xlu0 0
        %1061 = vperm.xlu0 %1060, %v1023
        %v1062 = vpop.permute.xlu0 %1061
        %1065 = vset.pattern.permute.xlu0 0
        %1066 = vperm.xlu0 %1065, %v1024
        %v1067 = vpop.permute.xlu0 %1066
        %1070 = vset.pattern.permute.xlu0 0
        %1071 = vperm.xlu0 %1070, %v1025
        %v1072 = vpop.permute.xlu0 %1071
        %1075 = vset.pattern.permute.xlu0 0
        %1076 = vperm.xlu0 %1075, %v1026
        %v1077 = vpop.permute.xlu0 %1076
        %1080 = vset.pattern.permute.xlu0 0
        %1081 = vperm.xlu0 %1080, %v1027
        %v1082 = vpop.permute.xlu0 %1081
        %1085 = vset.pattern.permute.xlu0 0
        %1086 = vperm.xlu0 %1085, %v1028
        %v1087 = vpop.permute.xlu0 %1086
        %1090 = vset.pattern.permute.xlu0 0
        %1091 = vperm.xlu0 %1090, %v1029
        %v1092 = vpop.permute.xlu0 %1091
        %1095 = vset.pattern.permute.xlu0 0
        %1096 = vperm.xlu0 %1095, %v1030
        %v1097 = vpop.permute.xlu0 %1096
        %1100 = vset.pattern.permute.xlu0 0
        %1101 = vperm.xlu0 %1100, %v1031
        %v1102 = vpop.permute.xlu0 %1101
        %1105 = vset.pattern.permute.xlu0 0
        %1106 = vperm.xlu0 %1105, %v1032
        %v1107 = vpop.permute.xlu0 %1106
        %1110 = vset.pattern.permute.xlu0 0
        %1111 = vperm.xlu0 %1110, %v1033
        %v1112 = vpop.permute.xlu0 %1111
        %1114 = vmatpush.msra.mxu0 %v999
        %1115 = vmatpush.msra.mxu0 %v998
        %1116 = vmatpush.msra.mxu0 %v997
        %1117 = vmatpush.msra.mxu0 %v996
        %1118 = vmatpush.msra.mxu0 %v995
        %1119 = vmatpush.msra.mxu0 %v994
        %1120 = vmatpush.msra.mxu0 %v993
        %1121 = vmatpush.msra.mxu0 %v992
        %1122 = vmatpush.msra.mxu0 %v991
        %1123 = vmatpush.msra.mxu0 %v990
        %1124 = vmatpush.msra.mxu0 %v989
        %1125 = vmatpush.msra.mxu0 %v988
        %1126 = vmatpush.msra.mxu0 %v987
        %1127 = vmatpush.msra.mxu0 %v986
        %1128 = vmatpush.msra.mxu0 %v985
        %1129 = vmatpush.msra.mxu0 %v984
        %1130 = vmatmul.f32.gmra.mxu0 %v1001
        %v1131 = vpop.f32.mrf.mxu0
        %v1132 = vadd.f32 %v1037, %v1131
        %1133 = vmatmul.f32.gmra.mxu0 %v1002
        %v1134 = vpop.f32.mrf.mxu0
        %v1135 = vadd.f32 %v1042, %v1134
        %1136 = vmatmul.f32.gmra.mxu0 %v1003
        %v1137 = vpop.f32.mrf.mxu0
        %v1138 = vadd.f32 %v1047, %v1137
        %1139 = vmatmul.f32.gmra.mxu0 %v1004
        %v1140 = vpop.f32.mrf.mxu0
        %v1141 = vadd.f32 %v1052, %v1140
        %1142 = vmatmul.f32.gmra.mxu0 %v1005
        %v1143 = vpop.f32.mrf.mxu0
        %v1144 = vadd.f32 %v1057, %v1143
        %1145 = vmatmul.f32.gmra.mxu0 %v1006
        %v1146 = vpop.f32.mrf.mxu0
        %v1147 = vadd.f32 %v1062, %v1146
        %1148 = vmatmul.f32.gmra.mxu0 %v1007
        %v1149 = vpop.f32.mrf.mxu0
        %v1150 = vadd.f32 %v1067, %v1149
        %1151 = vmatmul.f32.gmra.mxu0 %v1008
        %v1152 = vpop.f32.mrf.mxu0
        %v1153 = vadd.f32 %v1072, %v1152
        %1154 = vmatmul.f32.gmra.mxu0 %v1009
        %v1155 = vpop.f32.mrf.mxu0
        %v1156 = vadd.f32 %v1077, %v1155
        %1157 = vmatmul.f32.gmra.mxu0 %v1010
        %v1158 = vpop.f32.mrf.mxu0
        %v1159 = vadd.f32 %v1082, %v1158
        %1160 = vmatmul.f32.gmra.mxu0 %v1011
        %v1161 = vpop.f32.mrf.mxu0
        %v1162 = vadd.f32 %v1087, %v1161
        %1163 = vmatmul.f32.gmra.mxu0 %v1012
        %v1164 = vpop.f32.mrf.mxu0
        %v1165 = vadd.f32 %v1092, %v1164
        %1166 = vmatmul.f32.gmra.mxu0 %v1013
        %v1167 = vpop.f32.mrf.mxu0
        %v1168 = vadd.f32 %v1097, %v1167
        %1169 = vmatmul.f32.gmra.mxu0 %v1014
        %v1170 = vpop.f32.mrf.mxu0
        %v1171 = vadd.f32 %v1102, %v1170
        %1172 = vmatmul.f32.gmra.mxu0 %v1015
        %v1173 = vpop.f32.mrf.mxu0
        %v1174 = vadd.f32 %v1107, %v1173
        %1175 = vmatmul.f32.gmra.mxu0 %v1016
        %v1176 = vpop.f32.mrf.mxu0
        %v1177 = vadd.f32 %v1112, %v1176
        %1178 = vdwg.mxu0
        %v1179 = vtanh.pop %v1132
        %v1180 = vtanh.pop %v1135
        %v1181 = vtanh.pop %v1138
        %v1182 = vtanh.pop %v1141
        %v1183 = vtanh.pop %v1144
        %v1184 = vtanh.pop %v1147
        %v1185 = vtanh.pop %v1150
        %v1186 = vtanh.pop %v1153
        %v1187 = vtanh.pop %v1156
        %v1188 = vtanh.pop %v1159
        %v1189 = vtanh.pop %v1162
        %v1190 = vtanh.pop %v1165
        %v1191 = vtanh.pop %v1168
        %v1192 = vtanh.pop %v1171
        %v1193 = vtanh.pop %v1174
        %v1194 = vtanh.pop %v1177
        %v1195 = vld [vmem:[%s5] sm:$0xff]
        %v1196 = vld [vmem:[%s6] sm:$0xff]
        %1198 = vset.pattern.permute.xlu0 0
        %1199 = vperm.xlu0 %1198, %v1196
        %v1200 = vpop.permute.xlu0 %1199
        %1202 = vmatpush.msra.mxu0 %v1194
        %1203 = vmatpush.msra.mxu0 %v1193
        %1204 = vmatpush.msra.mxu0 %v1192
        %1205 = vmatpush.msra.mxu0 %v1191
        %1206 = vmatpush.msra.mxu0 %v1190
        %1207 = vmatpush.msra.mxu0 %v1189
        %1208 = vmatpush.msra.mxu0 %v1188
        %1209 = vmatpush.msra.mxu0 %v1187
        %1210 = vmatpush.msra.mxu0 %v1186
        %1211 = vmatpush.msra.mxu0 %v1185
        %1212 = vmatpush.msra.mxu0 %v1184
        %1213 = vmatpush.msra.mxu0 %v1183
        %1214 = vmatpush.msra.mxu0 %v1182
        %1215 = vmatpush.msra.mxu0 %v1181
        %1216 = vmatpush.msra.mxu0 %v1180
        %1217 = vmatpush.msra.mxu0 %v1179
        %1218 = vmatmul.f32.gmra.mxu0 %v1195
        %v1219 = vpop.f32.mrf.mxu0
        %v1220 = vadd.f32 %v1200, %v1219
        %1221 = vdwg.mxu0
        %v1222 = vlaneseq
        %v1223 = vshrl.u32 %v1222, 7
        %v1224 = vxor.u32 %v1220, 2147483648
        %v1225 = vmul.f32 %v1224, 1.442695
        %v1226 = vpow.pop %v1225
        %v1227 = vadd.f32 %v1226, 1.0
        %v1228 = vrcp.pop %v1227
        %v1229 = vmul.f32 %v1227, %v1228
        %v1230 = vsub.f32 1.0, %v1229
        %v1231 = vmul.f32 %v1228, %v1230
        %v1232 = vadd.f32 %v1228, %v1231
        %vm1233 = vweird.f32 %v1227
        %vm1234 = vweird.f32 %v1228
        %vm1235 = vmor %vm1233, %vm1234
        %v1236 = vsel %vm1235, %v1228, %v1232
        %v1237 = vand.u32 2147483647, %v1227
        %vm1238 = vcmp.eq.f32.partialorder %v1237, 8.507059e+37
        %v1239 = vand.u32 %v1227, 2147483648
        %v1240 = vor.u32 1.1754944e-38, %v1239
        %v1241 = vsel %vm1238, %v1240, %v1236
        %v1242 = vmul.f32 1.0, %v1241
        %v1243 = vmul.f32 %v1242, 0.29
        %v1244 = vadd.f32 %v1243, 0.01
        %v1245 = vsub.f32 %v1220, 35.0
        %v1246 = vmul.f32 %v1245, 1.442695
        %v1247 = vpow.pop %v1246
        %v1248 = vmul.f32 %v1242, 10.0
        %v1249 = vadd.f32 %v1248, 2.0
        %v1250 = vmax.f32 %v1220, 0.0
        %vm1251 = vcmp.eq.s32.totalorder %v1223, 0
        %vm1252 = vcmp.eq.s32.totalorder %v1223, 1
        %vm1253 = vcmp.eq.s32.totalorder %v1223, 2
        %v1254 = vsel %vm1253, %v1249, %v1250
        %v1255 = vsel %vm1252, %v1247, %v1254
        %v1256 = vsel %vm1251, %v1244, %v1255
        %1257 = vst [vmem:[%s269] sm:$0xff] %v1256
        %s1258 = sand.u32 %s181, 1
        %s1259 = scalar_lea.sflag [#allocation3], %s1258
        %s1260 = sand.u32 %s181, 1
        %s1261 = smul.addr %s1260, 8
        %s1262 = scalar_lea.vmem [#allocation2], %s1261
        // Predicated region
        $region49: #{tpu_custom_call.1} parent=47 // pred_check
          %p1263 = pneg %p191
        $region50: #{tpu_custom_call.1} parent=47 // pred_check_branch
          %1265 = sbr.rel (%p1263) target = $region52
        $region51: #{tpu_custom_call.1} parent=47 // pred_region
          %1267 = vsyncadd %s1259, 0
          %s1268 = smul.addr %s21, 8
          %s1269 = scalar_lea.hbm %s7, %s1268
          %s1271 = sshll.u32 %s1262, 4
          %s1272 = int_to_ptr.vmem [resolvable:$true] %s1271
          %s1273 = sshll.u32 %s1269, 4
          %s1274 = int_to_ptr.hbm [resolvable:$true] %s1273
          %1276 = dma.vmem_to_hbm [thread:$0]  %s1272, 128, %s1274, %s1259
        $region52: #{tpu_custom_call.1} parent=47 // pred_fallthru
          _
      $region48: #{tpu_custom_call.1} parent=5 // pred_fallthru
        _
      %p1277 = scmp.le.s32.totalorder 2, %s16
      // Predicated region
      $region53: #{tpu_custom_call.1} parent=5 // pred_check
        %p1278 = pneg %p1277
      $region54: #{tpu_custom_call.1} parent=5 // pred_check_branch
        %1280 = sbr.rel (%p1278) target = $region56
      $region55: #{tpu_custom_call.1} parent=5 // pred_region
        %s1281 = ssub.s32 %s16, 2
        // Predicated region
        $region57: #{tpu_custom_call.1} parent=55 // pred_check
          %p1282 = pneg %p197
        $region58: #{tpu_custom_call.1} parent=55 // pred_check_branch
          %1284 = sbr.rel (%p1282) target = $region60
        $region59: #{tpu_custom_call.1} parent=55 // pred_region
          %s1285 = sand.u32 %s182, 1
          %s1286 = scalar_lea.sflag [#allocation3], %s1285
          %s1287 = sand.u32 %s182, 1
          %s1288 = smul.addr %s1287, 8
          %s1289 = scalar_lea.vmem [#allocation2], %s1288
          %1291 = dma.done %s1286, 128
        $region60: #{tpu_custom_call.1} parent=55 // pred_fallthru
          _
      $region56: #{tpu_custom_call.1} parent=5 // pred_fallthru
        _
    $region6: #{tpu_custom_call.1} parent=1 // loop_footer
      %s20 = sadd.s32 1, %s16
    $region7: #{tpu_custom_call.1} parent=1 // loop_footer_branch
      %15 = sbr.rel target = $region3
    $region8: #{tpu_custom_call.1} parent=1 // loop_exit
      _
    %1292 = vsyncpa [#allocation3], 1
    %s1293 = scalar_lea.sflag [#allocation3], 1
    %1294 = vsyncpa %s1293, 1

</llo_original>
